<compile_context>
chip_gen: v7x
topology: tpu7x:2x2x1
jax: 0.10.0
libtpu: 0.0.40
codegen_flags: <defaults>
</compile_context>

<pallas_src>
import functools

import jax
import jax.numpy as jnp
from jax.experimental import pallas as pl
from jax.experimental.pallas import tpu as pltpu


def _round_up(x: int, m: int) -> int:
    return ((x + m - 1) // m) * m


# ---------------------------------------------------------------------------
# Fused fast path: whole x resident in VMEM, single pallas_call, no grid.
# ---------------------------------------------------------------------------
def _fused_kernel_factory(batch: int, epsilon: float):
    bc_py = float(batch)
    eps = float(epsilon)

    def kernel(x_ref, mean_ref, var_ref, count_ref,            # inputs
               out_ref, new_mean_ref, new_var_ref, new_count_ref):  # outputs
        x = x_ref[...].astype(jnp.float32)                      # (B, D)
        inv_bc = jnp.float32(1.0 / bc_py)
        batch_mean = jnp.sum(x, axis=0, keepdims=True) * inv_bc  # (1, D)
        centered = x - batch_mean
        batch_var = jnp.sum(centered * centered, axis=0, keepdims=True) * inv_bc

        old_mean = mean_ref[...]                                 # (1, D)
        old_var = var_ref[...]                                   # (1, D)
        old_count = count_ref[0]                                 # scalar f32 (SMEM)

        bc = jnp.float32(bc_py)
        total = old_count + bc
        delta = batch_mean - old_mean
        upd_mean = old_mean + delta * (bc / total)
        upd_var = (old_var * old_count + batch_var * bc
                   + delta * delta * (old_count * bc / total)) / total

        first = old_count == jnp.float32(0.0)
        new_mean = jnp.where(first, batch_mean, upd_mean)
        new_var = jnp.where(first, batch_var, upd_var)

        new_mean_ref[...] = new_mean
        new_var_ref[...] = new_var
        new_count_ref[0] = total

        inv_std = jax.lax.rsqrt(new_var + jnp.float32(eps))
        out_ref[...] = ((x - new_mean) * inv_std).astype(out_ref.dtype)

    return kernel


# ---------------------------------------------------------------------------
# Tiled path, pass 1: per-tile centered stats + Chan pairwise merge across tiles,
# Welford merge with the running statistics at the last grid step.
# ---------------------------------------------------------------------------
def _stats_kernel_factory(batch: int, tile_b: int, epsilon: float, ragged: bool):
    B = int(batch)
    TB = int(tile_b)
    eps = float(epsilon)

    def kernel(x_ref, mean_ref, var_ref, count_ref,                       # inputs
               new_mean_ref, new_var_ref, inv_std_ref, new_count_ref,     # outputs
               mean_acc, m2_acc):                                         # scratch
        i = pl.program_id(0)

        @pl.when(i == 0)
        def _init():
            mean_acc[...] = jnp.zeros_like(mean_acc)
            m2_acc[...] = jnp.zeros_like(m2_acc)

        x = x_ref[...].astype(jnp.float32)                      # (TB, D)

        if ragged:
            row = jax.lax.broadcasted_iota(jnp.int32, (TB, 1), 0) + i * TB
            valid = row < B
            n_b = jnp.minimum(jnp.int32(TB), jnp.int32(B) - i * TB).astype(jnp.float32)
            x_sum_src = jnp.where(valid, x, 0.0)
        else:
            valid = None
            n_b = jnp.float32(TB)
            x_sum_src = x

        mean_b = jnp.sum(x_sum_src, axis=0, keepdims=True) / n_b
        centered = x - mean_b
        if ragged:
            centered = jnp.where(valid, centered, 0.0)
        m2_b = jnp.sum(centered * centered, axis=0, keepdims=True)

        # Chan pairwise merge of (n_a, mean_acc, m2_acc) with this tile.
        n_a = (i * TB).astype(jnp.float32)           # all previous tiles are full
        n_ab = n_a + n_b
        delta = mean_b - mean_acc[...]
        mean_acc[...] = mean_acc[...] + delta * (n_b / n_ab)
        m2_acc[...] = m2_acc[...] + m2_b + delta * delta * (n_a * n_b / n_ab)

        @pl.when(i == pl.num_programs(0) - 1)
        def _finalize():
            bc = jnp.float32(B)
            batch_mean = mean_acc[...]
            batch_var = m2_acc[...] / bc

            old_mean = mean_ref[...]
            old_var = var_ref[...]
            old_count = count_ref[0]                 # scalar f32 (SMEM)

            total = old_count + bc
            d = batch_mean - old_mean
            upd_mean = old_mean + d * (bc / total)
            upd_var = (old_var * old_count + batch_var * bc
                       + d * d * (old_count * bc / total)) / total

            first = old_count == jnp.float32(0.0)
            new_mean = jnp.where(first, batch_mean, upd_mean)
            new_var = jnp.where(first, batch_var, upd_var)

            new_mean_ref[...] = new_mean
            new_var_ref[...] = new_var
            inv_std_ref[...] = jax.lax.rsqrt(new_var + jnp.float32(eps))
            new_count_ref[0] = total                 # scalar store (SMEM)

    return kernel


# ---------------------------------------------------------------------------
# Tiled path, pass 2: normalize with the updated statistics ("parallel").
# ---------------------------------------------------------------------------
def _normalize_kernel(x_ref, mean_ref, inv_std_ref, out_ref):
    out_ref[...] = ((x_ref[...].astype(jnp.float32) - mean_ref[...])
                    * inv_std_ref[...]).astype(out_ref.dtype)


@functools.partial(jax.jit,
                   static_argnames=("epsilon", "batch_tile", "max_fused_bytes"))
def running_mean_std_forward(x, mean, var, count, *, epsilon=1e-8,
                             batch_tile=None, max_fused_bytes=24 * 1024 * 1024):
    """Functional equivalent of RunningMeanStd.forward in training mode.

    Args:
      x:     (B, D) data (any float dtype).
      mean:  (D,)   running mean buffer.
      var:   (D,)   running var buffer.
      count: (1,)   running count buffer.
    Returns:
      normalized (B, D) in x.dtype, new_mean (D,), new_var (D,), new_count (1,)
    """
    B, D = x.shape
    itemsize = x.dtype.itemsize
    mean2d = mean.astype(jnp.float32).reshape(1, D)
    var2d = var.astype(jnp.float32).reshape(1, D)
    count1 = count.reshape(1).astype(jnp.float32)

    smem_spec = pl.BlockSpec(memory_space=pltpu.MemorySpace.SMEM)
    vmem_spec = pl.BlockSpec(memory_space=pltpu.MemorySpace.VMEM)

    io_bytes = 2 * B * D * itemsize  # x + out, VMEM-resident, no double buffering

    # ---------------- fused fast path: x + out fit in VMEM -------------------
    if io_bytes <= max_fused_bytes:
        vmem_limit = int(min(io_bytes + (4 << 20), 32 * 1024 * 1024))
        out, new_mean2d, new_var2d, new_count = pl.pallas_call(
            _fused_kernel_factory(B, epsilon),
            in_specs=[vmem_spec, vmem_spec, vmem_spec, smem_spec],
            out_specs=(vmem_spec, vmem_spec, vmem_spec, smem_spec),
            out_shape=(
                jax.ShapeDtypeStruct((B, D), x.dtype),
                jax.ShapeDtypeStruct((1, D), jnp.float32),
                jax.ShapeDtypeStruct((1, D), jnp.float32),
                jax.ShapeDtypeStruct((1,), jnp.float32),
            ),
            compiler_params=pltpu.CompilerParams(vmem_limit_bytes=vmem_limit),
        )(x, mean2d, var2d, count1)
        return out, new_mean2d[0], new_var2d[0], new_count

    # ---------------- tiled streaming path ------------------------------------
    row_bytes = max(D * itemsize, 1)
    if batch_tile is None:
        target = 2 * 1024 * 1024                 # ~2 MiB of x per block
        TB = max(target // row_bytes, 8)
    else:
        TB = max(int(batch_tile), 8)
    TB = min(_round_up(TB, 8), _round_up(B, 8))
    num_tiles = pl.cdiv(B, TB)
    ragged = (B % TB) != 0

    blk_in = TB * D * itemsize
    blk_out = TB * D * itemsize
    small = 16 * D * 4 + (1 << 16)
    vmem1 = int(min(2 * blk_in + small + (2 << 20), 32 * 1024 * 1024))
    vmem2 = int(min(2 * blk_in + 2 * blk_out + small + (2 << 20), 32 * 1024 * 1024))

    # ---- pass 1: batch statistics + Welford merge ("arbitrary" reduction) ----
    new_mean2d, new_var2d, inv_std2d, new_count = pl.pallas_call(
        _stats_kernel_factory(B, TB, epsilon, ragged),
        grid=(num_tiles,),
        in_specs=[
            pl.BlockSpec((TB, D), lambda i: (i, 0)),      # x tiles (native dtype)
            pl.BlockSpec((1, D), lambda i: (0, 0)),       # running mean
            pl.BlockSpec((1, D), lambda i: (0, 0)),       # running var
            smem_spec,                                    # count scalar
        ],
        out_specs=(
            pl.BlockSpec((1, D), lambda i: (0, 0)),       # new mean
            pl.BlockSpec((1, D), lambda i: (0, 0)),       # new var
            pl.BlockSpec((1, D), lambda i: (0, 0)),       # inv_std
            smem_spec,                                    # new count scalar
        ),
        out_shape=(
            jax.ShapeDtypeStruct((1, D), jnp.float32),
            jax.ShapeDtypeStruct((1, D), jnp.float32),
            jax.ShapeDtypeStruct((1, D), jnp.float32),
            jax.ShapeDtypeStruct((1,), jnp.float32),
        ),
        scratch_shapes=[
            pltpu.VMEM((1, D), jnp.float32),              # mean accumulator
            pltpu.VMEM((1, D), jnp.float32),              # M2 accumulator
        ],
        compiler_params=pltpu.CompilerParams(
            dimension_semantics=("arbitrary",),
            vmem_limit_bytes=vmem1),
    )(x, mean2d, var2d, count1)

    # ---- pass 2: normalize with the updated statistics ("parallel") ----------
    out = pl.pallas_call(
        _normalize_kernel,
        grid=(num_tiles,),
        in_specs=[
            pl.BlockSpec((TB, D), lambda i: (i, 0)),
            pl.BlockSpec((1, D), lambda i: (0, 0)),
            pl.BlockSpec((1, D), lambda i: (0, 0)),
        ],
        out_specs=pl.BlockSpec((TB, D), lambda i: (i, 0)),
        out_shape=jax.ShapeDtypeStruct((B, D), x.dtype),
        compiler_params=pltpu.CompilerParams(
            dimension_semantics=("parallel",),
            vmem_limit_bytes=vmem2),
    )(x, new_mean2d, inv_std2d)

    return out, new_mean2d[0], new_var2d[0], new_count


# ---------------------------------------------------------------------------
# Pure-JAX reference mirroring the PyTorch module (training mode).
# ---------------------------------------------------------------------------
def _reference_forward(x, mean, var, count, epsilon=1e-8):
    x = x.astype(jnp.float32)
    batch_mean = jnp.mean(x, axis=0)
    batch_var = jnp.var(x, axis=0)               # unbiased=False
    batch_count = jnp.float32(x.shape[0])
    total_count = count[0] + batch_count
    delta = batch_mean - mean
    upd_mean = mean + delta * batch_count / total_count
    upd_var = (var * count[0] + batch_var * batch_count
               + delta ** 2 * count[0] * batch_count / total_count) / total_count
    first = count[0] == 0
    new_mean = jnp.where(first, batch_mean, upd_mean)
    new_var = jnp.where(first, batch_var, upd_var)
    new_count = jnp.array([total_count], jnp.float32)
    out = (x - new_mean) / jnp.sqrt(new_var + epsilon)
    return out, new_mean, new_var, new_count


if __name__ == "__main__":
    key = jax.random.PRNGKey(0)
    k1, k2, k3 = jax.random.split(key, 3)

    # ---- case 1: module shape=(32,), two consecutive forward calls (hits the
    #              count==0 copy branch and the merge branch); fused fast path. ----
    B, D = 8, 32
    x1 = jax.random.normal(k1, (B, D), dtype=jnp.float32) * 2.0 + 1.5
    x2 = jax.random.normal(k2, (B, D), dtype=jnp.float32) * 0.5 - 0.3

    mean = jnp.zeros((D,), jnp.float32)
    var = jnp.ones((D,), jnp.float32)
    count = jnp.zeros((1,), jnp.float32)

    out1, mean, var, count = running_mean_std_forward(x1, mean, var, count)
    out2, mean, var, count = running_mean_std_forward(x2, mean, var, count)
    jax.block_until_ready((out1, out2, mean, var, count))

    r_mean = jnp.zeros((D,), jnp.float32)
    r_var = jnp.ones((D,), jnp.float32)
    r_count = jnp.zeros((1,), jnp.float32)
    ro1, r_mean, r_var, r_count = _reference_forward(x1, r_mean, r_var, r_count)
    ro2, r_mean, r_var, r_count = _reference_forward(x2, r_mean, r_var, r_count)

    assert jnp.allclose(out1, ro1, atol=1e-4, rtol=1e-4)
    assert jnp.allclose(out2, ro2, atol=1e-4, rtol=1e-4)
    assert jnp.allclose(mean, r_mean, atol=1e-4, rtol=1e-4)
    assert jnp.allclose(var, r_var, atol=1e-4, rtol=1e-4)
    assert jnp.allclose(count, r_count)

    # ---- case 2: force the tiled streaming path with ragged batch / feature
    #              sizes (multi-step grid, in-kernel row masking, Chan merge). ----
    B2, D2 = 100, 50
    x3 = jax.random.normal(k3, (B2, D2), dtype=jnp.float32) * 3.0 - 1.0
    m2 = jnp.zeros((D2,), jnp.float32)
    v2 = jnp.ones((D2,), jnp.float32)
    c2 = jnp.zeros((1,), jnp.float32)
    o3, m2, v2, c2 = running_mean_std_forward(
        x3, m2, v2, c2, batch_tile=32, max_fused_bytes=0)
    jax.block_until_ready((o3, m2, v2, c2))

    ro3, rm2, rv2, rc2 = _reference_forward(
        x3, jnp.zeros((D2,), jnp.float32), jnp.ones((D2,), jnp.float32),
        jnp.zeros((1,), jnp.float32))
    assert jnp.allclose(o3, ro3, atol=1e-4, rtol=1e-4)
    assert jnp.allclose(m2, rm2, atol=1e-4, rtol=1e-4)
    assert jnp.allclose(v2, rv2, atol=1e-4, rtol=1e-4)
    assert jnp.allclose(c2, rc2)

    print("KERNEL_OK")
</pallas_src>

<mosaic_0001>
module attributes {stable_mosaic.version = 11 : i64} {
  func.func @kernel(%arg0: memref<8x32xf32, #tpu.memory_space<vmem>>, %arg1: memref<1x32xf32, #tpu.memory_space<vmem>>, %arg2: memref<1x32xf32, #tpu.memory_space<vmem>>, %arg3: memref<1xf32, #tpu.memory_space<smem>>, %arg4: memref<8x32xf32, #tpu.memory_space<vmem>>, %arg5: memref<1x32xf32, #tpu.memory_space<vmem>>, %arg6: memref<1x32xf32, #tpu.memory_space<vmem>>, %arg7: memref<1xf32, #tpu.memory_space<smem>>) attributes {dimension_semantics = [], scalar_prefetch = 0 : i64, scratch_operands = 0 : i64, tpu.core_type = #tpu.core_type<tc>} {
    %c0 = arith.constant 0 : index
    %c0_0 = arith.constant 0 : index
    %0 = vector.load %arg0[%c0, %c0_0] : memref<8x32xf32, #tpu.memory_space<vmem>>, vector<8x32xf32>
    %cst = arith.constant dense<0.000000e+00> : vector<32xf32>
    %1 = vector.multi_reduction <add>, %0, %cst [0] : vector<8x32xf32> to vector<32xf32>
    %2 = vector.shape_cast %1 : vector<32xf32> to vector<1x32xf32>
    %cst_1 = arith.constant 1.250000e-01 : f32
    %3 = vector.broadcast %cst_1 : f32 to vector<1x32xf32>
    %4 = arith.mulf %2, %3 : vector<1x32xf32>
    %5 = vector.broadcast %4 : vector<1x32xf32> to vector<8x32xf32>
    %6 = arith.subf %0, %5 : vector<8x32xf32>
    %7 = arith.mulf %6, %6 : vector<8x32xf32>
    %cst_2 = arith.constant dense<0.000000e+00> : vector<32xf32>
    %8 = vector.multi_reduction <add>, %7, %cst_2 [0] : vector<8x32xf32> to vector<32xf32>
    %9 = vector.shape_cast %8 : vector<32xf32> to vector<1x32xf32>
    %cst_3 = arith.constant 1.250000e-01 : f32
    %10 = vector.broadcast %cst_3 : f32 to vector<1x32xf32>
    %11 = arith.mulf %9, %10 : vector<1x32xf32>
    %c0_4 = arith.constant 0 : index
    %c0_5 = arith.constant 0 : index
    %12 = vector.load %arg1[%c0_4, %c0_5] : memref<1x32xf32, #tpu.memory_space<vmem>>, vector<1x32xf32>
    %c0_6 = arith.constant 0 : index
    %c0_7 = arith.constant 0 : index
    %13 = vector.load %arg2[%c0_6, %c0_7] : memref<1x32xf32, #tpu.memory_space<vmem>>, vector<1x32xf32>
    %c0_8 = arith.constant 0 : index
    %14 = memref.load %arg3[%c0_8] : memref<1xf32, #tpu.memory_space<smem>>
    %cst_9 = arith.constant 8.000000e+00 : f32
    %15 = arith.addf %14, %cst_9 : f32
    %16 = arith.subf %4, %12 : vector<1x32xf32>
    %cst_10 = arith.constant 8.000000e+00 : f32
    %17 = arith.divf %cst_10, %15 : f32
    %18 = vector.broadcast %17 : f32 to vector<1x32xf32>
    %19 = arith.mulf %16, %18 : vector<1x32xf32>
    %20 = arith.addf %12, %19 : vector<1x32xf32>
    %21 = vector.broadcast %14 : f32 to vector<1x32xf32>
    %22 = arith.mulf %13, %21 : vector<1x32xf32>
    %cst_11 = arith.constant 8.000000e+00 : f32
    %23 = vector.broadcast %cst_11 : f32 to vector<1x32xf32>
    %24 = arith.mulf %11, %23 : vector<1x32xf32>
    %25 = arith.addf %22, %24 : vector<1x32xf32>
    %26 = arith.mulf %16, %16 : vector<1x32xf32>
    %cst_12 = arith.constant 8.000000e+00 : f32
    %27 = arith.mulf %14, %cst_12 : f32
    %28 = arith.divf %27, %15 : f32
    %29 = vector.broadcast %28 : f32 to vector<1x32xf32>
    %30 = arith.mulf %26, %29 : vector<1x32xf32>
    %31 = arith.addf %25, %30 : vector<1x32xf32>
    %32 = vector.broadcast %15 : f32 to vector<1x32xf32>
    %33 = arith.divf %31, %32 : vector<1x32xf32>
    %cst_13 = arith.constant 0.000000e+00 : f32
    %34 = arith.cmpf oeq, %14, %cst_13 : f32
    %35 = arith.select %34, %4, %20 : vector<1x32xf32>
    %36 = arith.select %34, %11, %33 : vector<1x32xf32>
    %c0_14 = arith.constant 0 : index
    %c0_15 = arith.constant 0 : index
    %37 = vector.load %arg5[%c0_14, %c0_15] : memref<1x32xf32, #tpu.memory_space<vmem>>, vector<1x32xf32>
    tpu.vector_store %arg5[%c0_14, %c0_15], %35 {strides = array<i32>} : memref<1x32xf32, #tpu.memory_space<vmem>>, vector<1x32xf32>,
    %c0_16 = arith.constant 0 : index
    %c0_17 = arith.constant 0 : index
    %38 = vector.load %arg6[%c0_16, %c0_17] : memref<1x32xf32, #tpu.memory_space<vmem>>, vector<1x32xf32>
    tpu.vector_store %arg6[%c0_16, %c0_17], %36 {strides = array<i32>} : memref<1x32xf32, #tpu.memory_space<vmem>>, vector<1x32xf32>,
    %c0_18 = arith.constant 0 : index
    %39 = memref.load %arg7[%c0_18] : memref<1xf32, #tpu.memory_space<smem>>
    memref.store %15, %arg7[%c0_18] : memref<1xf32, #tpu.memory_space<smem>>
    %cst_19 = arith.constant 9.99999993E-9 : f32
    %40 = vector.broadcast %cst_19 : f32 to vector<1x32xf32>
    %41 = arith.addf %36, %40 : vector<1x32xf32>
    %42 = math.rsqrt %41 : vector<1x32xf32>
    %43 = vector.broadcast %35 : vector<1x32xf32> to vector<8x32xf32>
    %44 = arith.subf %0, %43 : vector<8x32xf32>
    %45 = vector.broadcast %42 : vector<1x32xf32> to vector<8x32xf32>
    %46 = arith.mulf %44, %45 : vector<8x32xf32>
    %c0_20 = arith.constant 0 : index
    %c0_21 = arith.constant 0 : index
    %47 = vector.load %arg4[%c0_20, %c0_21] : memref<8x32xf32, #tpu.memory_space<vmem>>, vector<8x32xf32>
    tpu.vector_store %arg4[%c0_20, %c0_21], %46 {strides = array<i32>} : memref<8x32xf32, #tpu.memory_space<vmem>>, vector<8x32xf32>,
    return
  }
}

</mosaic_0001>

<llo_original>
// kernel: running_mean_std_forward.1
$region0: #{running_mean_std_forward.1}
  #allocation0 [shape = 'u32[]', space=smem, size = 0x4, offset = 0x4, fixed_abs, tag = 'smem constant byte address 0x4 - core index']
  #allocation1 [shape = 'u32[144,128]{1,0:T(1,128)}', space=vmem, size = 0x12000, scoped, tag = 'internal scratch']
  #allocation2 [shape = 'f32[1]{0:T(128)S(6)}', space=smem, size = 0x200, scoped, tag = 'scoped memory for running_mean_std_forward.1']
  %s0 = inlined_call_operand.vmem [shape: f32[8,32], index: 0, kind: input, shape index: {}]
  %s1 = inlined_call_operand.vmem [shape: f32[1,32], index: 1, kind: input, shape index: {}]
  %s2 = inlined_call_operand.vmem [shape: f32[1,32], index: 2, kind: input, shape index: {}]
  %s3 = inlined_call_operand.<no memory space> [shape: f32[1], index: 3, kind: input, shape index: {}]
  %s4 = inlined_call_operand.hbm [shape: f32[8,32], index: 4, kind: output, shape index: {0}]
  %s5 = inlined_call_operand.hbm [shape: f32[1,32], index: 5, kind: output, shape index: {1}]
  %s6 = inlined_call_operand.hbm [shape: f32[1,32], index: 6, kind: output, shape index: {2}]
  %s7 = inlined_call_operand.hbm [shape: f32[1], index: 7, kind: output, shape index: {3}]
  %8 = xla_tuple %s4, %s5, %s6, %s7
  %s9 = sld [smem:[#allocation0]]
  $region50: #{running_mean_std_forward.1} parent=0
    _
  %s11 = ssub.s32 1, %s9
  %s12 = scalar_select 0, %s11, %s9
  %13 = sst [smem:[#allocation2]] %s3
  $region1: #{running_mean_std_forward.1} parent=0
    #allocation3 [shape = 'u8[4096]{0}', space=vmem, size = 0x1000, scoped, tag = 'output window, operand 0, single buffered']
    #allocation4 [shape = 's32[1]{0}', space=sflag, size = 0x4, scoped, tag = 'scoped memory for running_mean_std_forward.1']
    #allocation5 [shape = 's32[1]{0}', space=sflag, size = 0x4, scoped, tag = 'scoped memory for running_mean_std_forward.1']
    #allocation6 [shape = 'u8[512]{0}', space=vmem, size = 0x400, scoped, tag = 'output window, operand 1, single buffered']
    #allocation7 [shape = 's32[1]{0}', space=sflag, size = 0x4, scoped, tag = 'scoped memory for running_mean_std_forward.1']
    #allocation8 [shape = 'u8[512]{0}', space=vmem, size = 0x400, scoped, tag = 'output window, operand 2, single buffered']
    #allocation9 [shape = 'u8[512]{0}', space=smem, size = 0x200, scoped, tag = 'output window, operand 3, single buffered']
    %14 = vsyncpa [#allocation4], 0
    %15 = vsyncpa [#allocation7], 0
    %16 = vsyncpa [#allocation5], 0
    // Predicated region
    $region2: #{running_mean_std_forward.1} parent=1 // pred_check
      _
    $region3: #{running_mean_std_forward.1} parent=1 // pred_check_branch
      %18 = sbr.rel (0) target = $region5
    $region4: #{running_mean_std_forward.1} parent=1 // pred_region
      _
    $region5: #{running_mean_std_forward.1} parent=1 // pred_fallthru
      _
    // Predicated region
    $region6: #{running_mean_std_forward.1} parent=1 // pred_check
      _
    $region7: #{running_mean_std_forward.1} parent=1 // pred_check_branch
      %20 = sbr.rel (0) target = $region9
    $region8: #{running_mean_std_forward.1} parent=1 // pred_region
      _
    $region9: #{running_mean_std_forward.1} parent=1 // pred_fallthru
      _
    // Predicated region
    $region10: #{running_mean_std_forward.1} parent=1 // pred_check
      _
    $region11: #{running_mean_std_forward.1} parent=1 // pred_check_branch
      %22 = sbr.rel (0) target = $region13
    $region12: #{running_mean_std_forward.1} parent=1 // pred_region
      _
    $region13: #{running_mean_std_forward.1} parent=1 // pred_fallthru
      _
    // Predicated region
    $region14: #{running_mean_std_forward.1} parent=1 // pred_check
      _
    $region15: #{running_mean_std_forward.1} parent=1 // pred_check_branch
      %24 = sbr.rel (0) target = $region17
    $region16: #{running_mean_std_forward.1} parent=1 // pred_region
      _
    $region17: #{running_mean_std_forward.1} parent=1 // pred_fallthru
      _
    %v25 = vld [vmem:[%s0] sm:$0xff]
    %vm26 = vcmask 261120
    %v27 = vsel %vm26, %v25, 0.0
    %v28 = vrot.slane %v27, 4
    %v29 = vadd.f32 %v27, %v28
    %v30 = vrot.slane %v29, 2
    %v31 = vadd.f32 %v29, %v30
    %v32 = vrot.slane %v31, 1
    %v33 = vadd.f32 %v31, %v32
    %v34 = vmul.f32 %v33, 0.125
    %v35 = vsub.f32 %v25, %v34
    %v36 = vmul.f32 %v35, %v35
    %v37 = vsel %vm26, %v36, 0.0
    %v38 = vrot.slane %v37, 4
    %v39 = vadd.f32 %v37, %v38
    %v40 = vrot.slane %v39, 2
    %v41 = vadd.f32 %v39, %v40
    %v42 = vrot.slane %v41, 1
    %v43 = vadd.f32 %v41, %v42
    %v44 = vmul.f32 %v43, 0.125
    %v45 = vld [vmem:[%s1] sm:$0x1]
    %v46 = vld [vmem:[%s2] sm:$0x1]
    %s47 = sld [smem:[#allocation2]]
    %s48 = sadd.f32 %s47, 8.0
    %v49 = vsub.f32 %v34, %v45
    %v50 = vstv %s48
    %v51 = vrcp.pop %v50
    %s52 = vtos %v51
    %s53 = smul.f32 8.0, %s52
    %v54 = vstv %s53
    %v55 = vmul.f32 %v49, %v54
    %v56 = vadd.f32 %v45, %v55
    %v57 = vstv %s47
    %v58 = vmul.f32 %v46, %v57
    %v59 = vmul.f32 %v44, 8.0
    %v60 = vadd.f32 %v58, %v59
    %v61 = vmul.f32 %v49, %v49
    %s62 = smul.f32 %s47, 8.0
    %v63 = vstv %s48
    %v64 = vrcp.pop %v63
    %s65 = vtos %v64
    %s66 = smul.f32 %s62, %s65
    %v67 = vstv %s66
    %v68 = vmul.f32 %v61, %v67
    %v69 = vadd.f32 %v60, %v68
    %v70 = vstv %s48
    %v71 = vrcp.pop %v70
    %v72 = vmul.f32 %v69, %v71
    %p73 = scmp.eq.f32.partialorder %s47, 0.0
    %s74 = scalar_select %p73, 1, 0
    %v75 = vstv %s74
    %vm76 = vcmp.eq.s32.totalorder %v75, 1
    %v77 = vsel %vm76, %v34, %v56
    %v78 = vsel %vm76, %v44, %v72
    %vm79 = vcmask 253952
    %80 = vst.msk [vmem:[#allocation6] sm:$0x1] %vm79, %v77
    %81 = vst.msk [vmem:[#allocation8] sm:$0x1] %vm79, %v78
    %s82 = scalar_lea.smem [#allocation9], 0
    %83 = sst [smem:[%s82]] %s48
    %v84 = vadd.f32 %v78, 1e-08
    %v85 = vrsqrt.pop %v84
    %v86 = vlaneseq
    %v87 = vshrl.u32 %v86, 7
    %v88 = vsub.s32 0, %v87
    %v89 = vrot.slane %v77, %v88
    %v90 = vsub.f32 %v25, %v89
    %v91 = vlaneseq
    %v92 = vshrl.u32 %v91, 7
    %v93 = vsub.s32 0, %v92
    %v94 = vrot.slane %v85, %v93
    %v95 = vmul.f32 %v90, %v94
    %96 = vst.msk [vmem:[#allocation3] sm:$0xff] %vm26, %v95
    // Predicated region
    $region18: #{running_mean_std_forward.1} parent=1 // pred_check
      _
    $region19: #{running_mean_std_forward.1} parent=1 // pred_check_branch
      %98 = sbr.rel (0) target = $region21
    $region20: #{running_mean_std_forward.1} parent=1 // pred_region
      %s100 = ssub.s32 128, 128
      %101 = vsyncadd [#allocation4], %s100
      %s103 = sshll.u32 [#allocation3], 4
      %s104 = int_to_ptr.vmem [resolvable:$true] %s103
      %106 = dma.vmem_to_hbm [thread:$0]  %s104, 128, %s4, [#allocation4]
    $region21: #{running_mean_std_forward.1} parent=1 // pred_fallthru
      _
    // Predicated region
    $region22: #{running_mean_std_forward.1} parent=1 // pred_check
      _
    $region23: #{running_mean_std_forward.1} parent=1 // pred_check_branch
      %108 = sbr.rel (0) target = $region25
    $region24: #{running_mean_std_forward.1} parent=1 // pred_region
      %s110 = ssub.s32 16, 16
      %111 = vsyncadd [#allocation7], %s110
      %s113 = sshll.u32 [#allocation6], 4
      %s114 = int_to_ptr.vmem [resolvable:$true] %s113
      %116 = dma.vmem_to_hbm [thread:$0]  %s114, 16, %s5, [#allocation7]
    $region25: #{running_mean_std_forward.1} parent=1 // pred_fallthru
      _
    // Predicated region
    $region26: #{running_mean_std_forward.1} parent=1 // pred_check
      _
    $region27: #{running_mean_std_forward.1} parent=1 // pred_check_branch
      %118 = sbr.rel (0) target = $region29
    $region28: #{running_mean_std_forward.1} parent=1 // pred_region
      %s120 = ssub.s32 16, 16
      %121 = vsyncadd [#allocation7], %s120
      %s123 = sshll.u32 [#allocation8], 4
      %s124 = int_to_ptr.vmem [resolvable:$true] %s123
      %126 = dma.vmem_to_hbm [thread:$0]  %s124, 16, %s6, [#allocation7]
    $region29: #{running_mean_std_forward.1} parent=1 // pred_fallthru
      _
    // Predicated region
    $region30: #{running_mean_std_forward.1} parent=1 // pred_check
      _
    $region31: #{running_mean_std_forward.1} parent=1 // pred_check_branch
      %128 = sbr.rel (0) target = $region33
    $region32: #{running_mean_std_forward.1} parent=1 // pred_region
      %s130 = ssub.s32 16, 16
      %131 = vsyncadd [#allocation5], %s130
      %134 = dma.smem_to_hbm [#allocation9], 16, %s7, [#allocation5]
    $region33: #{running_mean_std_forward.1} parent=1 // pred_fallthru
      _
    // Predicated region
    $region34: #{running_mean_std_forward.1} parent=1 // pred_check
      _
    $region35: #{running_mean_std_forward.1} parent=1 // pred_check_branch
      %136 = sbr.rel (0) target = $region37
    $region36: #{running_mean_std_forward.1} parent=1 // pred_region
      %137 = dma.done [#allocation4], 128
    $region37: #{running_mean_std_forward.1} parent=1 // pred_fallthru
      _
    // Predicated region
    $region38: #{running_mean_std_forward.1} parent=1 // pred_check
      _
    $region39: #{running_mean_std_forward.1} parent=1 // pred_check_branch
      %139 = sbr.rel (0) target = $region41
    $region40: #{running_mean_std_forward.1} parent=1 // pred_region
      %140 = dma.done [#allocation7], 16
    $region41: #{running_mean_std_forward.1} parent=1 // pred_fallthru
      _
    // Predicated region
    $region42: #{running_mean_std_forward.1} parent=1 // pred_check
      _
    $region43: #{running_mean_std_forward.1} parent=1 // pred_check_branch
      %142 = sbr.rel (0) target = $region45
    $region44: #{running_mean_std_forward.1} parent=1 // pred_region
      %143 = dma.done [#allocation7], 16
    $region45: #{running_mean_std_forward.1} parent=1 // pred_fallthru
      _
    // Predicated region
    $region46: #{running_mean_std_forward.1} parent=1 // pred_check
      _
    $region47: #{running_mean_std_forward.1} parent=1 // pred_check_branch
      %145 = sbr.rel (0) target = $region49
    $region48: #{running_mean_std_forward.1} parent=1 // pred_region
      %146 = dma.done [#allocation5], 16
    $region49: #{running_mean_std_forward.1} parent=1 // pred_fallthru
      _
    %147 = sfence
    %148 = vsyncpa [#allocation4], 1
    %149 = vsyncpa [#allocation7], 1
    %150 = vsyncpa [#allocation5], 1

</llo_original>
